<compile_context>
chip_gen: v6e
topology: v6e:2x2x1
jax: 0.10.0
libtpu: 0.0.40
codegen_flags: <defaults>
</compile_context>

<pallas_src>
import math
from functools import partial

import jax
import jax.numpy as jnp
from jax.experimental import pallas as pl
from jax.experimental.pallas import tpu as pltpu

_LANE = 128
_BLOCK_BYTES = 4 * 1024 * 1024            # ~4 MiB f32 footprint per pipelined block
_FUSED_ITEM_MAX_BYTES = 4 * 1024 * 1024   # fused single-pass top_db if one item fits this
_VMEM_LIMIT = 48 * 1024 * 1024            # scoped VMEM cap; safe on v5e/v6e/v7x


def _prod(xs):
    p = 1
    for v in xs:
        p *= int(v)
    return p


def _sublane(dtype):
    # minimum second-minor tile: 8 (4-byte), 16 (2-byte), 32 (1-byte) dtypes
    return max(8, 32 // jnp.dtype(dtype).itemsize)


def _row_cap(ld, sub, block_bytes):
    # rows per block so one block's f32 compute footprint stays ~block_bytes
    return max(sub, (block_bytes // (ld * 4)) // sub * sub)


# -----------------------------------------------------------------------------
# Kernels
# -----------------------------------------------------------------------------
def _amp2db_elementwise_kernel(x_ref, o_ref, *, multiplier, amin, db_offset):
    # Pure elementwise path (top_db is None): HBM-bandwidth bound.
    x = x_ref[...].astype(jnp.float32)
    o_ref[...] = (multiplier * jnp.log10(jnp.maximum(x, amin))
                  - db_offset).astype(o_ref.dtype)


def _amp2db_topdb_fused_kernel(x_ref, o_ref, *, multiplier, amin, db_offset,
                               top_db):
    # Whole item resident in VMEM: 1 HBM read + 1 HBM write total.
    x = x_ref[...].astype(jnp.float32)                # (1, R, Ld)
    scale = 10.0 ** (-top_db / multiplier)            # compile-time constant
    item_max = jnp.maximum(jnp.max(x), amin)
    cutoff = jnp.maximum(amin, item_max * scale)
    # exact monotonic rewrite of the top_db floor (single EUP log per element)
    o_ref[...] = (multiplier * jnp.log10(jnp.maximum(x, cutoff))
                  - db_offset).astype(o_ref.dtype)


def _item_max_kernel(x_ref, mx_ref, *, amin, tr, cps, rows, need_mask):
    # Running per-(item, split) max of clamp(x, amin).  The clamp is hoisted
    # into the accumulator init / mask fill (no full-block elementwise max).
    c = pl.program_id(2)

    @pl.when(c == 0)
    def _():
        mx_ref[...] = jnp.full(mx_ref.shape, amin, dtype=mx_ref.dtype)

    x = x_ref[...].astype(jnp.float32)                # (1, tr, Ld)
    if need_mask:
        # Partial boundary chunk: rows past `rows` are garbage and must not
        # feed the max.
        chunk = pl.program_id(1) * cps + c            # global chunk index
        row = jax.lax.broadcasted_iota(jnp.int32, x.shape, dimension=1)
        x = jnp.where(chunk * tr + row < rows, x, amin)
    mx_ref[...] = jnp.maximum(mx_ref[...], jnp.max(x))


def _amp2db_topdb_kernel(mx_ref, x_ref, o_ref, *, multiplier, amin, db_offset,
                         top_db):
    # Pass 2: scalar cutoff + one EUP log per element.
    scale = 10.0 ** (-top_db / multiplier)
    item_max = jnp.max(mx_ref[...])                   # all lanes equal -> scalar
    cutoff = jnp.maximum(amin, item_max * scale)
    x = x_ref[...].astype(jnp.float32)
    o_ref[...] = (multiplier * jnp.log10(jnp.maximum(x, cutoff))
                  - db_offset).astype(o_ref.dtype)


# -----------------------------------------------------------------------------
# Wrappers
# -----------------------------------------------------------------------------
def _elementwise(x, multiplier, amin, db_offset, block_bytes):
    shape = x.shape
    dtype = x.dtype
    total = _prod(shape)
    if total == 0:
        return x
    sub = _sublane(dtype)

    if total % _LANE == 0:
        ld = _LANE                                    # lane-dense, unmasked stores
    else:
        # full-last-dim escape: no pad, no slice (reshape of contiguous is free)
        ld = int(shape[-1]) if len(shape) else 1
        if ld * 4 * sub > 2 * block_bytes:
            # rare: huge unaligned trailing dim -> pay one pad + one slice pass
            pad = (-total) % _LANE
            xp = jnp.pad(x.reshape(-1), (0, pad))
            out = _elementwise(xp.reshape(-1, _LANE), multiplier, amin,
                               db_offset, block_bytes)
            return out.reshape(-1)[:total].reshape(shape)
    rows = total // ld
    x2 = x.reshape(rows, ld)

    cap = _row_cap(ld, sub, block_bytes)
    tr = rows if rows <= cap else cap                 # full-dim escape for small inputs
    n_chunks = pl.cdiv(rows, tr)                      # boundary block OK: OOB writes dropped

    out = pl.pallas_call(
        partial(_amp2db_elementwise_kernel, multiplier=multiplier, amin=amin,
                db_offset=db_offset),
        out_shape=jax.ShapeDtypeStruct((rows, ld), dtype),
        grid_spec=pltpu.PrefetchScalarGridSpec(
            num_scalar_prefetch=0,
            grid=(n_chunks,),
            in_specs=[pl.BlockSpec((tr, ld), lambda c: (c, 0))],
            out_specs=pl.BlockSpec((tr, ld), lambda c: (c, 0)),
        ),
        compiler_params=pltpu.CompilerParams(
            dimension_semantics=("parallel",), vmem_limit_bytes=_VMEM_LIMIT),
    )(x2)
    return out.reshape(shape)


def _top_db_on_slab(x3, multiplier, amin, db_offset, top_db,
                    fused_item_max_bytes, block_bytes):
    B, R, Ld = (int(d) for d in x3.shape)
    dtype = x3.dtype
    sub = _sublane(dtype)

    if R * Ld * 4 <= fused_item_max_bytes:
        # Fused single pass: skip pass 1 entirely (1 read + 1 write of HBM).
        return pl.pallas_call(
            partial(_amp2db_topdb_fused_kernel, multiplier=multiplier,
                    amin=amin, db_offset=db_offset, top_db=top_db),
            out_shape=jax.ShapeDtypeStruct((B, R, Ld), dtype),
            grid_spec=pltpu.PrefetchScalarGridSpec(
                num_scalar_prefetch=0,
                grid=(B,),
                in_specs=[pl.BlockSpec((1, R, Ld), lambda b: (b, 0, 0))],
                out_specs=pl.BlockSpec((1, R, Ld), lambda b: (b, 0, 0)),
            ),
            compiler_params=pltpu.CompilerParams(
                dimension_semantics=("parallel",),
                vmem_limit_bytes=_VMEM_LIMIT),
        )(x3)

    # ---- two-pass fallback: item too large for VMEM ------------------------
    cap = _row_cap(Ld, sub, block_bytes)
    tr = R if R <= cap else cap
    n_chunks = pl.cdiv(R, tr)
    need_mask = (R % tr) != 0
    # Split the reduction axis into 2 "parallel" halves when it divides evenly
    # so v7x's two TensorCores share pass 1 even for B==1; harmless on v5e/v6e.
    S = 2 if (n_chunks >= 4 and n_chunks % 2 == 0) else 1
    cps = n_chunks // S

    mx = pl.pallas_call(
        partial(_item_max_kernel, amin=amin, tr=tr, cps=cps, rows=R,
                need_mask=need_mask),
        out_shape=jax.ShapeDtypeStruct((B, S, 1, _LANE), jnp.float32),
        grid_spec=pltpu.PrefetchScalarGridSpec(
            num_scalar_prefetch=0,
            grid=(B, S, cps),
            in_specs=[pl.BlockSpec((1, tr, Ld),
                                   lambda b, s, c: (b, s * cps + c, 0))],
            out_specs=pl.BlockSpec((1, 1, 1, _LANE),
                                   lambda b, s, c: (b, s, 0, 0)),
        ),
        compiler_params=pltpu.CompilerParams(
            dimension_semantics=("parallel", "parallel", "arbitrary"),
            vmem_limit_bytes=_VMEM_LIMIT),
    )(x3)
    item_max = jnp.max(mx, axis=1)                    # (B, 1, LANE): tiny reduce over splits

    return pl.pallas_call(
        partial(_amp2db_topdb_kernel, multiplier=multiplier, amin=amin,
                db_offset=db_offset, top_db=top_db),
        out_shape=jax.ShapeDtypeStruct((B, R, Ld), dtype),
        grid_spec=pltpu.PrefetchScalarGridSpec(
            num_scalar_prefetch=0,
            grid=(B, n_chunks),
            in_specs=[pl.BlockSpec((1, 1, _LANE), lambda b, c: (b, 0, 0)),
                      pl.BlockSpec((1, tr, Ld), lambda b, c: (b, c, 0))],
            out_specs=pl.BlockSpec((1, tr, Ld), lambda b, c: (b, c, 0)),
        ),
        compiler_params=pltpu.CompilerParams(
            dimension_semantics=("parallel", "parallel"),
            vmem_limit_bytes=_VMEM_LIMIT),
    )(item_max, x3)


def amplitude_to_db(x, stype="power", top_db=None, *,
                    fused_item_max_bytes=_FUSED_ITEM_MAX_BYTES,
                    block_bytes=_BLOCK_BYTES):
    """Pallas implementation of AmplitudeToDB.forward."""
    if top_db is not None and top_db < 0:
        raise ValueError("top_db must be positive value")
    multiplier = 10.0 if stype == "power" else 20.0
    amin = 1e-10
    ref_value = 1.0
    db_multiplier = math.log10(max(amin, ref_value))
    db_offset = multiplier * db_multiplier

    if top_db is None:
        return _elementwise(x, multiplier, amin, db_offset, block_bytes)

    shape = x.shape
    # torchaudio semantics: amax over the last min(ndim, 3) dims; leading dims
    # (if any) are a batch of independent items.
    k = min(x.ndim, 3)
    item_shape = shape[x.ndim - k:]
    B = _prod(shape[:x.ndim - k])
    N = _prod(item_shape)
    if N == 0 or B == 0:
        return x
    sub = _sublane(x.dtype)

    if N % _LANE == 0:
        ld = _LANE
    else:
        ld = int(item_shape[-1]) if item_shape else 1
        if ld * 4 * sub > 2 * block_bytes:
            # rare: huge unaligned trailing dim -> zero-pad each item to a lane
            # multiple (zeros clamp to amin, never affect the item max), slice back.
            pad = (-N) % _LANE
            xp = jnp.pad(x.reshape(B, N), ((0, 0), (0, pad)))
            out = _top_db_on_slab(xp.reshape(B, (N + pad) // _LANE, _LANE),
                                  multiplier, amin, db_offset, top_db,
                                  fused_item_max_bytes, block_bytes)
            return out.reshape(B, N + pad)[:, :N].reshape(shape)
    out = _top_db_on_slab(x.reshape(B, N // ld, ld), multiplier, amin,
                          db_offset, top_db, fused_item_max_bytes, block_bytes)
    return out.reshape(shape)


# -----------------------------------------------------------------------------
# Reference + self-check
# -----------------------------------------------------------------------------
def _reference(x, stype="power", top_db=None):
    multiplier = 10.0 if stype == "power" else 20.0
    amin = 1e-10
    db_multiplier = math.log10(max(amin, 1.0))
    xf = x.astype(jnp.float32)
    x_db = multiplier * jnp.log10(jnp.maximum(xf, amin)) - multiplier * db_multiplier
    if top_db is not None:
        k = min(x.ndim, 3)
        axes = tuple(range(x.ndim - k, x.ndim))
        mx = jnp.max(x_db, axis=axes, keepdims=True)
        x_db = jnp.maximum(x_db, mx - top_db)
    return x_db.astype(x.dtype)


if __name__ == "__main__":
    key = jax.random.PRNGKey(0)
    keys = jax.random.split(key, 8)

    def check(x, stype, top_db, tol=1e-4, **kw):
        y = jax.block_until_ready(amplitude_to_db(x, stype, top_db, **kw))
        ref = _reference(x, stype, top_db)
        assert y.shape == x.shape and y.dtype == x.dtype, (y.shape, y.dtype)
        assert jnp.allclose(y.astype(jnp.float32), ref.astype(jnp.float32),
                            atol=tol, rtol=tol), \
            f"mismatch: shape={x.shape} stype={stype} top_db={top_db} kw={kw}"

    # power-spectrogram-like non-negative inputs
    x0 = jax.random.uniform(keys[0], (2, 4, 16, 16), jnp.float32) ** 2
    check(x0, "power", None)                    # elementwise, lane-dense
    check(x0, "magnitude", 40.0)                # fused single-pass top_db
    check(x0.astype(jnp.bfloat16), "power", None, tol=2e-2)   # bf16 I/O passthrough

    x1 = jax.random.uniform(keys[1], (2, 3, 16, 10), jnp.float32) ** 2
    check(x1, "power", None)                    # unaligned: full-last-dim layout, no pad/slice
    check(x1, "power", 60.0)                    # fused top_db on the unaligned layout

    x2 = jax.random.uniform(keys[2], (4, 16, 16), jnp.float32) ** 2
    check(x2, "power", 30.0)                    # 3-D: single global max (torchaudio semantics)

    x3 = jax.random.uniform(keys[3], (2, 5, 7, 10), jnp.float32) ** 2
    check(x3, "magnitude", 25.0)                # odd dims, full-dim block escape

    # tiny budgets force the tiled / two-pass / masked / split code paths
    x4 = jax.random.uniform(keys[4], (2, 4, 40, 16), jnp.float32) ** 2
    check(x4, "power", 80.0, fused_item_max_bytes=0, block_bytes=4096)   # masked partial chunk
    x5 = jax.random.uniform(keys[5], (2, 4, 64, 16), jnp.float32) ** 2
    check(x5, "power", 50.0, fused_item_max_bytes=0, block_bytes=4096)   # S=2 split reduction
    x6 = jax.random.uniform(keys[6], (1, 4, 44, 16), jnp.float32) ** 2
    check(x6, "power", None, block_bytes=4096)                           # boundary elementwise block

    print("KERNEL_OK")
</pallas_src>

<mosaic_0001>
module attributes {stable_mosaic.version = 11 : i64} {
  func.func @_amp2db_elementwise_kernel(%arg0: i32, %arg1: memref<16x128xf32, #tpu.memory_space<vmem>>, %arg2: memref<16x128xf32, #tpu.memory_space<vmem>>) attributes {dimension_semantics = [#tpu.dimension_semantics<parallel>], iteration_bounds = array<i64: 1>, scalar_prefetch = 0 : i64, scratch_operands = 0 : i64, tpu.core_type = #tpu.core_type<tc>, window_params = [{transform_indices = @transform_0, window_bounds = array<i64: 16, 128>}, {transform_indices = @transform_1, window_bounds = array<i64: 16, 128>}]} {
    %c0 = arith.constant 0 : index
    %c0_0 = arith.constant 0 : index
    %0 = vector.load %arg1[%c0, %c0_0] : memref<16x128xf32, #tpu.memory_space<vmem>>, vector<16x128xf32>
    %cst = arith.constant 1.000000e-10 : f32
    %1 = vector.broadcast %cst : f32 to vector<16x128xf32>
    %2 = arith.maximumf %0, %1 : vector<16x128xf32>
    %3 = math.log %2 : vector<16x128xf32>
    %cst_1 = arith.constant 0.434294492 : f32
    %4 = vector.broadcast %cst_1 : f32 to vector<16x128xf32>
    %5 = arith.mulf %3, %4 : vector<16x128xf32>
    %cst_2 = arith.constant 1.000000e+01 : f32
    %6 = vector.broadcast %cst_2 : f32 to vector<16x128xf32>
    %7 = arith.mulf %6, %5 : vector<16x128xf32>
    %cst_3 = arith.constant 0.000000e+00 : f32
    %8 = vector.broadcast %cst_3 : f32 to vector<16x128xf32>
    %9 = arith.subf %7, %8 : vector<16x128xf32>
    %c0_4 = arith.constant 0 : index
    %c0_5 = arith.constant 0 : index
    %10 = vector.load %arg2[%c0_4, %c0_5] : memref<16x128xf32, #tpu.memory_space<vmem>>, vector<16x128xf32>
    tpu.vector_store %arg2[%c0_4, %c0_5], %9 {strides = array<i32>} : memref<16x128xf32, #tpu.memory_space<vmem>>, vector<16x128xf32>,
    return
  }
  func.func @transform_0(%arg0: i32) -> (i32, i32) {
    %c0_i32 = arith.constant 0 : i32
    %c0_i32_0 = arith.constant 0 : i32
    return %arg0, %c0_i32 : i32, i32
  }
  func.func @transform_1(%arg0: i32) -> (i32, i32) {
    %c0_i32 = arith.constant 0 : i32
    %c0_i32_0 = arith.constant 0 : i32
    return %arg0, %c0_i32 : i32, i32
  }
}

</mosaic_0001>

<llo_original>
// kernel: tpu_custom_call.1
$region0: #{tpu_custom_call.1}
  #allocation0 [shape = 'u32[]', space=smem, size = 0x4, offset = 0x4, fixed_abs, tag = 'smem constant byte address 0x4 - core index']
  #allocation1 [shape = 'u32[144,128]{1,0:T(1,128)}', space=vmem, size = 0x12000, scoped, tag = 'internal scratch']
  %s0 = inlined_call_operand.hbm [shape: f32[16,128], index: 0, kind: input, shape index: {}]
  %s1 = inlined_call_operand.hbm [shape: f32[16,128], index: 1, kind: output, shape index: {}]
  %s2 = sld [smem:[#allocation0]]
  $region18: #{tpu_custom_call.1} parent=0
    _
  %s4 = ssub.s32 1, %s2
  %s5 = scalar_select 0, %s4, %s2
  $region1: #{tpu_custom_call.1} parent=0
    #allocation2 [shape = 'u8[8192]{0}', space=vmem, size = 0x2000, scoped, tag = 'input window, operand 0, single buffered']
    #allocation3 [shape = 's32[1]{0}', space=sflag, size = 0x4, scoped, tag = 'scoped memory for tpu_custom_call.1']
    #allocation4 [shape = 's32[1]{0}', space=sflag, size = 0x4, scoped, tag = 'scoped memory for tpu_custom_call.1']
    #allocation5 [shape = 'u8[8192]{0}', space=vmem, size = 0x2000, scoped, tag = 'output window, operand 0, single buffered']
    %6 = vsyncpa [#allocation3], 0
    %7 = vsyncpa [#allocation4], 0
    // Predicated region
    $region2: #{tpu_custom_call.1} parent=1 // pred_check
      _
    $region3: #{tpu_custom_call.1} parent=1 // pred_check_branch
      %9 = sbr.rel (0) target = $region5
    $region4: #{tpu_custom_call.1} parent=1 // pred_region
      %s11 = ssub.s32 256, 256
      %12 = vsyncadd [#allocation3], %s11
      %s13 = sshll.u32 [#allocation2], 4
      %s14 = int_to_ptr.vmem [resolvable:$true] %s13
      %19 = dma.hbm_to_vmem [thread:$0]  %s0, 256, %s14, [#allocation3], 128, 128, 8
    $region5: #{tpu_custom_call.1} parent=1 // pred_fallthru
      _
    // Predicated region
    $region6: #{tpu_custom_call.1} parent=1 // pred_check
      _
    $region7: #{tpu_custom_call.1} parent=1 // pred_check_branch
      %21 = sbr.rel (0) target = $region9
    $region8: #{tpu_custom_call.1} parent=1 // pred_region
      %22 = dma.done [#allocation3], 256
    $region9: #{tpu_custom_call.1} parent=1 // pred_fallthru
      _
    %v23 = vld [vmem:[#allocation2] sm:$0xff]
    %v24 = vld [vmem:[#allocation2 + $0x8] sm:$0xff]
    %v25 = vmax.f32 %v23, 1e-10
    %v26 = vmax.f32 %v24, 1e-10
    %v27 = vlog2.pop %v25
    %v28 = vmul.f32 %v27, 0.6931472
    %v29 = vlog2.pop %v26
    %v30 = vmul.f32 %v29, 0.6931472
    %v31 = vmul.f32 %v28, 0.4342945
    %v32 = vmul.f32 %v30, 0.4342945
    %v33 = vmul.f32 %v31, 10.0
    %v34 = vmul.f32 %v32, 10.0
    %35 = vst [vmem:[#allocation5] sm:$0xff] %v33
    %36 = vst [vmem:[#allocation5 + $0x8] sm:$0xff] %v34
    // Predicated region
    $region10: #{tpu_custom_call.1} parent=1 // pred_check
      _
    $region11: #{tpu_custom_call.1} parent=1 // pred_check_branch
      %38 = sbr.rel (0) target = $region13
    $region12: #{tpu_custom_call.1} parent=1 // pred_region
      %s40 = ssub.s32 256, 256
      %41 = vsyncadd [#allocation4], %s40
      %s42 = sshll.u32 [#allocation5], 4
      %s43 = int_to_ptr.vmem [resolvable:$true] %s42
      %48 = dma.vmem_to_hbm [thread:$0]  %s43, 256, %s1, [#allocation4], 128, 128, 8
    $region13: #{tpu_custom_call.1} parent=1 // pred_fallthru
      _
    // Predicated region
    $region14: #{tpu_custom_call.1} parent=1 // pred_check
      _
    $region15: #{tpu_custom_call.1} parent=1 // pred_check_branch
      %50 = sbr.rel (0) target = $region17
    $region16: #{tpu_custom_call.1} parent=1 // pred_region
      %51 = dma.done [#allocation4], 256
    $region17: #{tpu_custom_call.1} parent=1 // pred_fallthru
      _
    %52 = vsyncpa [#allocation3], 1
    %53 = vsyncpa [#allocation4], 1

</llo_original>
